<compile_context>
chip_gen: v5e
topology: v5e:2x2
jax: 0.10.0
libtpu: 0.0.40
codegen_flags: <defaults>
</compile_context>

<pallas_src>
import jax
import jax.numpy as jnp
from jax.experimental import pallas as pl
from jax.experimental.pallas import tpu as pltpu


def _name_classifier_kernel(ids_ref, emb_ref, h0_ref, c0_ref, wih_ref, whh_ref,
                            b_ref, wfc_ref, bfc_ref,
                            out_ref, hn_ref, cn_ref, hs_sc):
    V, _E = emb_ref.shape
    B, H = h0_ref.shape
    SB = ids_ref.shape[1]
    S = SB // B

    # ---- embedding gather as a one-hot matmul (padding row 0 of the table is 0)
    # ids are lane-major (1, S*B): sublane-broadcast compare against a dim-0
    # iota, then contract the vocab dim of both operands (transposed-LHS matmul).
    # NOTE: ids outside [0, V) yield a zero embedding instead of raising.
    ids = ids_ref[...]                                                  # (1, S*B) int32
    onehot_t = (jax.lax.broadcasted_iota(jnp.int32, (V, SB), 0) == ids
                ).astype(jnp.float32)                                   # (V, S*B)
    x_emb = jax.lax.dot_general(
        onehot_t, emb_ref[...],
        dimension_numbers=(((0,), (0,)), ((), ())),
        preferred_element_type=jnp.float32)                             # (S*B, E)

    # ---- g-gate (3rd 4H-block, PyTorch order i,f,g,o) pre-activation x2 so
    # tanh(x) = 2*sigmoid(2x) - 1 needs no second EUP pass inside the loop.
    col = jax.lax.broadcasted_iota(jnp.int32, (1, 4 * H), 1)
    gscale = jnp.where((col >= 2 * H) & (col < 3 * H), 2.0, 1.0
                       ).astype(jnp.float32)                            # (1, 4H)

    # ---- input projection hoisted out of the recurrence ----
    xproj = (jnp.dot(x_emb, wih_ref[...], preferred_element_type=jnp.float32)
             + b_ref[...]) * gscale                                     # (S*B, 4H)
    whh = whh_ref[...] * gscale                                         # (H, 4H)

    h = h0_ref[...]                                                     # (B, H)
    c = c0_ref[...]                                                     # (B, H)

    # TODO(synk): holding W_hh resident in the MXU across the unrolled steps via
    # pltpu.matmul_push_rhs / matmul_acc_lhs / matmul_pop would remove the
    # per-step weight reload from the serial h->h chain; kept as jnp.dot here.
    for t in range(S):
        gates = xproj[t * B:(t + 1) * B, :] + jnp.dot(
            h, whh, preferred_element_type=jnp.float32)                 # (B, 4H)
        sig = jax.nn.sigmoid(gates)                                     # single EUP pass
        i_g = sig[:, 0 * H:1 * H]
        f_g = sig[:, 1 * H:2 * H]
        g_g = 2.0 * sig[:, 2 * H:3 * H] - 1.0                           # tanh via sigmoid (VPU)
        o_g = sig[:, 3 * H:4 * H]
        c = f_g * c + i_g * g_g
        h = o_g * jnp.tanh(c)
        hs_sc[pl.ds(t * B, B), :] = h                                   # off the h->h chain

    hn_ref[...] = h
    cn_ref[...] = c

    # ---- fc decoupled from the recurrence: one matmul, one dense store ----
    out_ref[...] = (jnp.dot(hs_sc[...], wfc_ref[...],
                            preferred_element_type=jnp.float32)
                    + bfc_ref[...])                                     # (S*B, V)


def name_classifier_forward(x, params, hidden=None):
    """x: (B, S) int32 token ids.  Returns (out (B,S,V), (h_n (1,B,H), c_n (1,B,H)))."""
    emb_table = params["embedding"]                 # (V, E)
    B, S = x.shape
    V, E = emb_table.shape
    H = params["w_hh"].shape[0]

    # lane-major, time-major flattened ids: column n = s*B + b  <->  x[b, s]
    ids_lm = x.T.reshape(1, S * B).astype(jnp.int32)

    if hidden is None:
        h0 = jnp.zeros((B, H), jnp.float32)
        c0 = jnp.zeros((B, H), jnp.float32)
    else:
        h0 = hidden[0].reshape(B, H).astype(jnp.float32)
        c0 = hidden[1].reshape(B, H).astype(jnp.float32)

    vmem = lambda: pl.BlockSpec(memory_space=pltpu.MemorySpace.VMEM)

    out_flat, h_n, c_n = pl.pallas_call(
        _name_classifier_kernel,
        out_shape=(jax.ShapeDtypeStruct((S * B, V), jnp.float32),
                   jax.ShapeDtypeStruct((B, H), jnp.float32),
                   jax.ShapeDtypeStruct((B, H), jnp.float32)),
        in_specs=[vmem() for _ in range(9)],        # whole arrays, single DMA each
        out_specs=(vmem(), vmem(), vmem()),
        scratch_shapes=[pltpu.VMEM((S * B, H), jnp.float32)],  # hidden-state stash
    )(ids_lm, emb_table, h0, c0, params["w_ih"], params["w_hh"], params["b"],
      params["w_fc"], params["b_fc"])

    out = out_flat.reshape(S, B, V).transpose(1, 0, 2)   # -> (B, S, V)
    return out, (h_n[None], c_n[None])                   # hidden like PyTorch: (1, B, H)


def init_params(vocab_size, embed_dim, hidden_dim, seed=42):
    """Deterministic parameter init mirroring the PyTorch module's shapes."""
    key = jax.random.PRNGKey(seed)
    k_emb, k_wih, k_whh, k_bih, k_bhh, k_wfc, k_bfc = jax.random.split(key, 7)

    # nn.Embedding(vocab, embed, padding_idx=0): N(0,1), row 0 zeroed
    emb = jax.random.normal(k_emb, (vocab_size, embed_dim), jnp.float32)
    emb = emb.at[0].set(0.0)

    k = 1.0 / jnp.sqrt(hidden_dim)
    # PyTorch stores weight_ih (4H, E) / weight_hh (4H, H); kept transposed for x @ W
    w_ih = jax.random.uniform(k_wih, (embed_dim, 4 * hidden_dim), jnp.float32, -k, k)
    w_hh = jax.random.uniform(k_whh, (hidden_dim, 4 * hidden_dim), jnp.float32, -k, k)
    b_ih = jax.random.uniform(k_bih, (4 * hidden_dim,), jnp.float32, -k, k)
    b_hh = jax.random.uniform(k_bhh, (4 * hidden_dim,), jnp.float32, -k, k)
    b = (b_ih + b_hh)[None, :]                                  # (1, 4H)

    kf = 1.0 / jnp.sqrt(hidden_dim)
    w_fc = jax.random.uniform(k_wfc, (hidden_dim, vocab_size), jnp.float32, -kf, kf)
    b_fc = jax.random.uniform(k_bfc, (vocab_size,), jnp.float32, -kf, kf)[None, :]

    return dict(embedding=emb, w_ih=w_ih, w_hh=w_hh, b=b, w_fc=w_fc, b_fc=b_fc)


def reference_forward(x, params, hidden=None):
    """Pure-JAX reference (lax.scan LSTM) for correctness checking."""
    emb = jnp.take(params["embedding"], x, axis=0)
    B, S, E = emb.shape
    H = params["w_hh"].shape[0]
    if hidden is None:
        h = jnp.zeros((B, H), jnp.float32)
        c = jnp.zeros((B, H), jnp.float32)
    else:
        h, c = hidden[0][0], hidden[1][0]

    def step(carry, x_t):
        h, c = carry
        gates = x_t @ params["w_ih"] + h @ params["w_hh"] + params["b"][0]
        i = jax.nn.sigmoid(gates[:, :H])
        f = jax.nn.sigmoid(gates[:, H:2 * H])
        g = jnp.tanh(gates[:, 2 * H:3 * H])
        o = jax.nn.sigmoid(gates[:, 3 * H:])
        c = f * c + i * g
        h = o * jnp.tanh(c)
        return (h, c), h

    (h, c), hs = jax.lax.scan(step, (h, c), jnp.transpose(emb, (1, 0, 2)))
    outs = jnp.einsum("sbh,hv->sbv", hs, params["w_fc"]) + params["b_fc"][0]
    return jnp.transpose(outs, (1, 0, 2)), (h[None], c[None])


if __name__ == "__main__":
    VOCAB, EMBED, HIDDEN = 16, 32, 32
    BATCH, SEQ = 2, 8          # note: batching 8+ names per call fills sublanes for free

    params = init_params(VOCAB, EMBED, HIDDEN)

    key = jax.random.PRNGKey(0)
    x = jax.random.randint(key, (BATCH, SEQ), 0, VOCAB, dtype=jnp.int32)

    out, (h_n, c_n) = name_classifier_forward(x, params)
    jax.block_until_ready((out, h_n, c_n))

    ref_out, (ref_h, ref_c) = reference_forward(x, params)
    assert out.shape == (BATCH, SEQ, VOCAB)
    assert h_n.shape == (1, BATCH, HIDDEN) and c_n.shape == (1, BATCH, HIDDEN)
    # tanh computed as 2*sigmoid(2x)-1 in-kernel: exact math, tiny f32 rounding delta
    assert jnp.allclose(out, ref_out, atol=5e-5, rtol=5e-5)
    assert jnp.allclose(h_n, ref_h, atol=5e-5, rtol=5e-5)
    assert jnp.allclose(c_n, ref_c, atol=5e-5, rtol=5e-5)

    print("KERNEL_OK")
</pallas_src>

<mosaic_0001>
module attributes {stable_mosaic.version = 11 : i64} {
  func.func @_name_classifier_kernel(%arg0: memref<1x16xi32, #tpu.memory_space<vmem>>, %arg1: memref<16x32xf32, #tpu.memory_space<vmem>>, %arg2: memref<2x32xf32, #tpu.memory_space<vmem>>, %arg3: memref<2x32xf32, #tpu.memory_space<vmem>>, %arg4: memref<32x128xf32, #tpu.memory_space<vmem>>, %arg5: memref<32x128xf32, #tpu.memory_space<vmem>>, %arg6: memref<1x128xf32, #tpu.memory_space<vmem>>, %arg7: memref<32x16xf32, #tpu.memory_space<vmem>>, %arg8: memref<1x16xf32, #tpu.memory_space<vmem>>, %arg9: memref<16x16xf32, #tpu.memory_space<vmem>>, %arg10: memref<2x32xf32, #tpu.memory_space<vmem>>, %arg11: memref<2x32xf32, #tpu.memory_space<vmem>>, %arg12: memref<16x32xf32, #tpu.memory_space<vmem>>) attributes {dimension_semantics = [], scalar_prefetch = 0 : i64, scratch_operands = 1 : i64, tpu.core_type = #tpu.core_type<tc>} {
    %c0 = arith.constant 0 : index
    %c0_0 = arith.constant 0 : index
    %0 = vector.load %arg0[%c0, %c0_0] : memref<1x16xi32, #tpu.memory_space<vmem>>, vector<1x16xi32>
    %1 = tpu.iota {dimensions = array<i32: 0>} : vector<16x16xi32>
    %2 = vector.broadcast %0 : vector<1x16xi32> to vector<16x16xi32>
    %3 = arith.cmpi eq, %1, %2 : vector<16x16xi32>
    %4 = arith.extui %3 : vector<16x16xi1> to vector<16x16xi32>
    %5 = arith.sitofp %4 : vector<16x16xi32> to vector<16x16xf32>
    %c0_1 = arith.constant 0 : index
    %c0_2 = arith.constant 0 : index
    %6 = vector.load %arg1[%c0_1, %c0_2] : memref<16x32xf32, #tpu.memory_space<vmem>>, vector<16x32xf32>
    %cst = arith.constant dense<0.000000e+00> : vector<16x32xf32>
    %7 = tpu.matmul %5, %6, %cst {dimension_numbers = #tpu.dot_dimension_numbers<[0], [0], [1], [1], [0, 1, 1, 1], [], []>} : vector<16x16xf32>, vector<16x32xf32>, vector<16x32xf32> -> vector<16x32xf32>
    %8 = tpu.iota {dimensions = array<i32: 1>} : vector<1x128xi32>
    %c64_i32 = arith.constant 64 : i32
    %9 = vector.broadcast %c64_i32 : i32 to vector<1x128xi32>
    %10 = arith.cmpi sge, %8, %9 : vector<1x128xi32>
    %c96_i32 = arith.constant 96 : i32
    %11 = vector.broadcast %c96_i32 : i32 to vector<1x128xi32>
    %12 = arith.cmpi slt, %8, %11 : vector<1x128xi32>
    %13 = arith.andi %10, %12 : vector<1x128xi1>
    %cst_3 = arith.constant 2.000000e+00 : f32
    %cst_4 = arith.constant 1.000000e+00 : f32
    %14 = vector.broadcast %cst_3 : f32 to vector<1x128xf32>
    %15 = vector.broadcast %cst_4 : f32 to vector<1x128xf32>
    %16 = arith.select %13, %14, %15 : vector<1x128xi1>, vector<1x128xf32>
    %c0_5 = arith.constant 0 : index
    %c0_6 = arith.constant 0 : index
    %17 = vector.load %arg4[%c0_5, %c0_6] : memref<32x128xf32, #tpu.memory_space<vmem>>, vector<32x128xf32>
    %cst_7 = arith.constant dense<0.000000e+00> : vector<16x128xf32>
    %18 = tpu.matmul %7, %17, %cst_7 {dimension_numbers = #tpu.dot_dimension_numbers<[1], [0], [0], [1], [0, 0, 1, 1], [], []>} : vector<16x32xf32>, vector<32x128xf32>, vector<16x128xf32> -> vector<16x128xf32>
    %c0_8 = arith.constant 0 : index
    %c0_9 = arith.constant 0 : index
    %19 = vector.load %arg6[%c0_8, %c0_9] : memref<1x128xf32, #tpu.memory_space<vmem>>, vector<1x128xf32>
    %20 = vector.broadcast %19 : vector<1x128xf32> to vector<16x128xf32>
    %21 = arith.addf %18, %20 : vector<16x128xf32>
    %22 = vector.broadcast %16 : vector<1x128xf32> to vector<16x128xf32>
    %23 = arith.mulf %21, %22 : vector<16x128xf32>
    %c0_10 = arith.constant 0 : index
    %c0_11 = arith.constant 0 : index
    %24 = vector.load %arg5[%c0_10, %c0_11] : memref<32x128xf32, #tpu.memory_space<vmem>>, vector<32x128xf32>
    %25 = vector.broadcast %16 : vector<1x128xf32> to vector<32x128xf32>
    %26 = arith.mulf %24, %25 : vector<32x128xf32>
    %c0_12 = arith.constant 0 : index
    %c0_13 = arith.constant 0 : index
    %27 = vector.load %arg2[%c0_12, %c0_13] : memref<2x32xf32, #tpu.memory_space<vmem>>, vector<2x32xf32>
    %c0_14 = arith.constant 0 : index
    %c0_15 = arith.constant 0 : index
    %28 = vector.load %arg3[%c0_14, %c0_15] : memref<2x32xf32, #tpu.memory_space<vmem>>, vector<2x32xf32>
    %29 = vector.extract_strided_slice %23 {offsets = [0, 0], sizes = [2, 128], strides = [1, 1]} : vector<16x128xf32> to vector<2x128xf32>
    %cst_16 = arith.constant dense<0.000000e+00> : vector<2x128xf32>
    %30 = tpu.matmul %27, %26, %cst_16 {dimension_numbers = #tpu.dot_dimension_numbers<[1], [0], [0], [1], [0, 0, 1, 1], [], []>} : vector<2x32xf32>, vector<32x128xf32>, vector<2x128xf32> -> vector<2x128xf32>
    %31 = arith.addf %29, %30 : vector<2x128xf32>
    %32 = arith.negf %31 : vector<2x128xf32>
    %33 = math.exp %32 : vector<2x128xf32>
    %cst_17 = arith.constant 1.000000e+00 : f32
    %34 = vector.broadcast %cst_17 : f32 to vector<2x128xf32>
    %35 = arith.addf %34, %33 : vector<2x128xf32>
    %36 = arith.divf %34, %35 : vector<2x128xf32>
    %37 = vector.extract_strided_slice %36 {offsets = [0, 0], sizes = [2, 32], strides = [1, 1]} : vector<2x128xf32> to vector<2x32xf32>
    %38 = vector.extract_strided_slice %36 {offsets = [0, 32], sizes = [2, 32], strides = [1, 1]} : vector<2x128xf32> to vector<2x32xf32>
    %39 = vector.extract_strided_slice %36 {offsets = [0, 64], sizes = [2, 32], strides = [1, 1]} : vector<2x128xf32> to vector<2x32xf32>
    %cst_18 = arith.constant 2.000000e+00 : f32
    %40 = vector.broadcast %cst_18 : f32 to vector<2x32xf32>
    %41 = arith.mulf %40, %39 : vector<2x32xf32>
    %cst_19 = arith.constant 1.000000e+00 : f32
    %42 = vector.broadcast %cst_19 : f32 to vector<2x32xf32>
    %43 = arith.subf %41, %42 : vector<2x32xf32>
    %44 = vector.extract_strided_slice %36 {offsets = [0, 96], sizes = [2, 32], strides = [1, 1]} : vector<2x128xf32> to vector<2x32xf32>
    %45 = arith.mulf %38, %28 : vector<2x32xf32>
    %46 = arith.mulf %37, %43 : vector<2x32xf32>
    %47 = arith.addf %45, %46 : vector<2x32xf32>
    %48 = math.tanh %47 : vector<2x32xf32>
    %49 = arith.mulf %44, %48 : vector<2x32xf32>
    %c0_20 = arith.constant 0 : index
    %c0_21 = arith.constant 0 : index
    %50 = vector.load %arg12[%c0_20, %c0_21] : memref<16x32xf32, #tpu.memory_space<vmem>>, vector<2x32xf32>
    tpu.vector_store %arg12[%c0_20, %c0_21], %49 {strides = array<i32>} : memref<16x32xf32, #tpu.memory_space<vmem>>, vector<2x32xf32>,
    %51 = vector.extract_strided_slice %23 {offsets = [2, 0], sizes = [2, 128], strides = [1, 1]} : vector<16x128xf32> to vector<2x128xf32>
    %cst_22 = arith.constant dense<0.000000e+00> : vector<2x128xf32>
    %52 = tpu.matmul %49, %26, %cst_22 {dimension_numbers = #tpu.dot_dimension_numbers<[1], [0], [0], [1], [0, 0, 1, 1], [], []>} : vector<2x32xf32>, vector<32x128xf32>, vector<2x128xf32> -> vector<2x128xf32>
    %53 = arith.addf %51, %52 : vector<2x128xf32>
    %54 = arith.negf %53 : vector<2x128xf32>
    %55 = math.exp %54 : vector<2x128xf32>
    %cst_23 = arith.constant 1.000000e+00 : f32
    %56 = vector.broadcast %cst_23 : f32 to vector<2x128xf32>
    %57 = arith.addf %56, %55 : vector<2x128xf32>
    %58 = arith.divf %56, %57 : vector<2x128xf32>
    %59 = vector.extract_strided_slice %58 {offsets = [0, 0], sizes = [2, 32], strides = [1, 1]} : vector<2x128xf32> to vector<2x32xf32>
    %60 = vector.extract_strided_slice %58 {offsets = [0, 32], sizes = [2, 32], strides = [1, 1]} : vector<2x128xf32> to vector<2x32xf32>
    %61 = vector.extract_strided_slice %58 {offsets = [0, 64], sizes = [2, 32], strides = [1, 1]} : vector<2x128xf32> to vector<2x32xf32>
    %cst_24 = arith.constant 2.000000e+00 : f32
    %62 = vector.broadcast %cst_24 : f32 to vector<2x32xf32>
    %63 = arith.mulf %62, %61 : vector<2x32xf32>
    %cst_25 = arith.constant 1.000000e+00 : f32
    %64 = vector.broadcast %cst_25 : f32 to vector<2x32xf32>
    %65 = arith.subf %63, %64 : vector<2x32xf32>
    %66 = vector.extract_strided_slice %58 {offsets = [0, 96], sizes = [2, 32], strides = [1, 1]} : vector<2x128xf32> to vector<2x32xf32>
    %67 = arith.mulf %60, %47 : vector<2x32xf32>
    %68 = arith.mulf %59, %65 : vector<2x32xf32>
    %69 = arith.addf %67, %68 : vector<2x32xf32>
    %70 = math.tanh %69 : vector<2x32xf32>
    %71 = arith.mulf %66, %70 : vector<2x32xf32>
    %c2 = arith.constant 2 : index
    %c0_26 = arith.constant 0 : index
    %72 = vector.load %arg12[%c2, %c0_26] : memref<16x32xf32, #tpu.memory_space<vmem>>, vector<2x32xf32>
    tpu.vector_store %arg12[%c2, %c0_26], %71 {strides = array<i32>} : memref<16x32xf32, #tpu.memory_space<vmem>>, vector<2x32xf32>,
    %73 = vector.extract_strided_slice %23 {offsets = [4, 0], sizes = [2, 128], strides = [1, 1]} : vector<16x128xf32> to vector<2x128xf32>
    %cst_27 = arith.constant dense<0.000000e+00> : vector<2x128xf32>
    %74 = tpu.matmul %71, %26, %cst_27 {dimension_numbers = #tpu.dot_dimension_numbers<[1], [0], [0], [1], [0, 0, 1, 1], [], []>} : vector<2x32xf32>, vector<32x128xf32>, vector<2x128xf32> -> vector<2x128xf32>
    %75 = arith.addf %73, %74 : vector<2x128xf32>
    %76 = arith.negf %75 : vector<2x128xf32>
    %77 = math.exp %76 : vector<2x128xf32>
    %cst_28 = arith.constant 1.000000e+00 : f32
    %78 = vector.broadcast %cst_28 : f32 to vector<2x128xf32>
    %79 = arith.addf %78, %77 : vector<2x128xf32>
    %80 = arith.divf %78, %79 : vector<2x128xf32>
    %81 = vector.extract_strided_slice %80 {offsets = [0, 0], sizes = [2, 32], strides = [1, 1]} : vector<2x128xf32> to vector<2x32xf32>
    %82 = vector.extract_strided_slice %80 {offsets = [0, 32], sizes = [2, 32], strides = [1, 1]} : vector<2x128xf32> to vector<2x32xf32>
    %83 = vector.extract_strided_slice %80 {offsets = [0, 64], sizes = [2, 32], strides = [1, 1]} : vector<2x128xf32> to vector<2x32xf32>
    %cst_29 = arith.constant 2.000000e+00 : f32
    %84 = vector.broadcast %cst_29 : f32 to vector<2x32xf32>
    %85 = arith.mulf %84, %83 : vector<2x32xf32>
    %cst_30 = arith.constant 1.000000e+00 : f32
    %86 = vector.broadcast %cst_30 : f32 to vector<2x32xf32>
    %87 = arith.subf %85, %86 : vector<2x32xf32>
    %88 = vector.extract_strided_slice %80 {offsets = [0, 96], sizes = [2, 32], strides = [1, 1]} : vector<2x128xf32> to vector<2x32xf32>
    %89 = arith.mulf %82, %69 : vector<2x32xf32>
    %90 = arith.mulf %81, %87 : vector<2x32xf32>
    %91 = arith.addf %89, %90 : vector<2x32xf32>
    %92 = math.tanh %91 : vector<2x32xf32>
    %93 = arith.mulf %88, %92 : vector<2x32xf32>
    %c4 = arith.constant 4 : index
    %c0_31 = arith.constant 0 : index
    %94 = vector.load %arg12[%c4, %c0_31] : memref<16x32xf32, #tpu.memory_space<vmem>>, vector<2x32xf32>
    tpu.vector_store %arg12[%c4, %c0_31], %93 {strides = array<i32>} : memref<16x32xf32, #tpu.memory_space<vmem>>, vector<2x32xf32>,
    %95 = vector.extract_strided_slice %23 {offsets = [6, 0], sizes = [2, 128], strides = [1, 1]} : vector<16x128xf32> to vector<2x128xf32>
    %cst_32 = arith.constant dense<0.000000e+00> : vector<2x128xf32>
    %96 = tpu.matmul %93, %26, %cst_32 {dimension_numbers = #tpu.dot_dimension_numbers<[1], [0], [0], [1], [0, 0, 1, 1], [], []>} : vector<2x32xf32>, vector<32x128xf32>, vector<2x128xf32> -> vector<2x128xf32>
    %97 = arith.addf %95, %96 : vector<2x128xf32>
    %98 = arith.negf %97 : vector<2x128xf32>
    %99 = math.exp %98 : vector<2x128xf32>
    %cst_33 = arith.constant 1.000000e+00 : f32
    %100 = vector.broadcast %cst_33 : f32 to vector<2x128xf32>
    %101 = arith.addf %100, %99 : vector<2x128xf32>
    %102 = arith.divf %100, %101 : vector<2x128xf32>
    %103 = vector.extract_strided_slice %102 {offsets = [0, 0], sizes = [2, 32], strides = [1, 1]} : vector<2x128xf32> to vector<2x32xf32>
    %104 = vector.extract_strided_slice %102 {offsets = [0, 32], sizes = [2, 32], strides = [1, 1]} : vector<2x128xf32> to vector<2x32xf32>
    %105 = vector.extract_strided_slice %102 {offsets = [0, 64], sizes = [2, 32], strides = [1, 1]} : vector<2x128xf32> to vector<2x32xf32>
    %cst_34 = arith.constant 2.000000e+00 : f32
    %106 = vector.broadcast %cst_34 : f32 to vector<2x32xf32>
    %107 = arith.mulf %106, %105 : vector<2x32xf32>
    %cst_35 = arith.constant 1.000000e+00 : f32
    %108 = vector.broadcast %cst_35 : f32 to vector<2x32xf32>
    %109 = arith.subf %107, %108 : vector<2x32xf32>
    %110 = vector.extract_strided_slice %102 {offsets = [0, 96], sizes = [2, 32], strides = [1, 1]} : vector<2x128xf32> to vector<2x32xf32>
    %111 = arith.mulf %104, %91 : vector<2x32xf32>
    %112 = arith.mulf %103, %109 : vector<2x32xf32>
    %113 = arith.addf %111, %112 : vector<2x32xf32>
    %114 = math.tanh %113 : vector<2x32xf32>
    %115 = arith.mulf %110, %114 : vector<2x32xf32>
    %c6 = arith.constant 6 : index
    %c0_36 = arith.constant 0 : index
    %116 = vector.load %arg12[%c6, %c0_36] : memref<16x32xf32, #tpu.memory_space<vmem>>, vector<2x32xf32>
    tpu.vector_store %arg12[%c6, %c0_36], %115 {strides = array<i32>} : memref<16x32xf32, #tpu.memory_space<vmem>>, vector<2x32xf32>,
    %117 = vector.extract_strided_slice %23 {offsets = [8, 0], sizes = [2, 128], strides = [1, 1]} : vector<16x128xf32> to vector<2x128xf32>
    %cst_37 = arith.constant dense<0.000000e+00> : vector<2x128xf32>
    %118 = tpu.matmul %115, %26, %cst_37 {dimension_numbers = #tpu.dot_dimension_numbers<[1], [0], [0], [1], [0, 0, 1, 1], [], []>} : vector<2x32xf32>, vector<32x128xf32>, vector<2x128xf32> -> vector<2x128xf32>
    %119 = arith.addf %117, %118 : vector<2x128xf32>
    %120 = arith.negf %119 : vector<2x128xf32>
    %121 = math.exp %120 : vector<2x128xf32>
    %cst_38 = arith.constant 1.000000e+00 : f32
    %122 = vector.broadcast %cst_38 : f32 to vector<2x128xf32>
    %123 = arith.addf %122, %121 : vector<2x128xf32>
    %124 = arith.divf %122, %123 : vector<2x128xf32>
    %125 = vector.extract_strided_slice %124 {offsets = [0, 0], sizes = [2, 32], strides = [1, 1]} : vector<2x128xf32> to vector<2x32xf32>
    %126 = vector.extract_strided_slice %124 {offsets = [0, 32], sizes = [2, 32], strides = [1, 1]} : vector<2x128xf32> to vector<2x32xf32>
    %127 = vector.extract_strided_slice %124 {offsets = [0, 64], sizes = [2, 32], strides = [1, 1]} : vector<2x128xf32> to vector<2x32xf32>
    %cst_39 = arith.constant 2.000000e+00 : f32
    %128 = vector.broadcast %cst_39 : f32 to vector<2x32xf32>
    %129 = arith.mulf %128, %127 : vector<2x32xf32>
    %cst_40 = arith.constant 1.000000e+00 : f32
    %130 = vector.broadcast %cst_40 : f32 to vector<2x32xf32>
    %131 = arith.subf %129, %130 : vector<2x32xf32>
    %132 = vector.extract_strided_slice %124 {offsets = [0, 96], sizes = [2, 32], strides = [1, 1]} : vector<2x128xf32> to vector<2x32xf32>
    %133 = arith.mulf %126, %113 : vector<2x32xf32>
    %134 = arith.mulf %125, %131 : vector<2x32xf32>
    %135 = arith.addf %133, %134 : vector<2x32xf32>
    %136 = math.tanh %135 : vector<2x32xf32>
    %137 = arith.mulf %132, %136 : vector<2x32xf32>
    %c8 = arith.constant 8 : index
    %c0_41 = arith.constant 0 : index
    %138 = vector.load %arg12[%c8, %c0_41] : memref<16x32xf32, #tpu.memory_space<vmem>>, vector<2x32xf32>
    tpu.vector_store %arg12[%c8, %c0_41], %137 {strides = array<i32>} : memref<16x32xf32, #tpu.memory_space<vmem>>, vector<2x32xf32>,
    %139 = vector.extract_strided_slice %23 {offsets = [10, 0], sizes = [2, 128], strides = [1, 1]} : vector<16x128xf32> to vector<2x128xf32>
    %cst_42 = arith.constant dense<0.000000e+00> : vector<2x128xf32>
    %140 = tpu.matmul %137, %26, %cst_42 {dimension_numbers = #tpu.dot_dimension_numbers<[1], [0], [0], [1], [0, 0, 1, 1], [], []>} : vector<2x32xf32>, vector<32x128xf32>, vector<2x128xf32> -> vector<2x128xf32>
    %141 = arith.addf %139, %140 : vector<2x128xf32>
    %142 = arith.negf %141 : vector<2x128xf32>
    %143 = math.exp %142 : vector<2x128xf32>
    %cst_43 = arith.constant 1.000000e+00 : f32
    %144 = vector.broadcast %cst_43 : f32 to vector<2x128xf32>
    %145 = arith.addf %144, %143 : vector<2x128xf32>
    %146 = arith.divf %144, %145 : vector<2x128xf32>
    %147 = vector.extract_strided_slice %146 {offsets = [0, 0], sizes = [2, 32], strides = [1, 1]} : vector<2x128xf32> to vector<2x32xf32>
    %148 = vector.extract_strided_slice %146 {offsets = [0, 32], sizes = [2, 32], strides = [1, 1]} : vector<2x128xf32> to vector<2x32xf32>
    %149 = vector.extract_strided_slice %146 {offsets = [0, 64], sizes = [2, 32], strides = [1, 1]} : vector<2x128xf32> to vector<2x32xf32>
    %cst_44 = arith.constant 2.000000e+00 : f32
    %150 = vector.broadcast %cst_44 : f32 to vector<2x32xf32>
    %151 = arith.mulf %150, %149 : vector<2x32xf32>
    %cst_45 = arith.constant 1.000000e+00 : f32
    %152 = vector.broadcast %cst_45 : f32 to vector<2x32xf32>
    %153 = arith.subf %151, %152 : vector<2x32xf32>
    %154 = vector.extract_strided_slice %146 {offsets = [0, 96], sizes = [2, 32], strides = [1, 1]} : vector<2x128xf32> to vector<2x32xf32>
    %155 = arith.mulf %148, %135 : vector<2x32xf32>
    %156 = arith.mulf %147, %153 : vector<2x32xf32>
    %157 = arith.addf %155, %156 : vector<2x32xf32>
    %158 = math.tanh %157 : vector<2x32xf32>
    %159 = arith.mulf %154, %158 : vector<2x32xf32>
    %c10 = arith.constant 10 : index
    %c0_46 = arith.constant 0 : index
    %160 = vector.load %arg12[%c10, %c0_46] : memref<16x32xf32, #tpu.memory_space<vmem>>, vector<2x32xf32>
    tpu.vector_store %arg12[%c10, %c0_46], %159 {strides = array<i32>} : memref<16x32xf32, #tpu.memory_space<vmem>>, vector<2x32xf32>,
    %161 = vector.extract_strided_slice %23 {offsets = [12, 0], sizes = [2, 128], strides = [1, 1]} : vector<16x128xf32> to vector<2x128xf32>
    %cst_47 = arith.constant dense<0.000000e+00> : vector<2x128xf32>
    %162 = tpu.matmul %159, %26, %cst_47 {dimension_numbers = #tpu.dot_dimension_numbers<[1], [0], [0], [1], [0, 0, 1, 1], [], []>} : vector<2x32xf32>, vector<32x128xf32>, vector<2x128xf32> -> vector<2x128xf32>
    %163 = arith.addf %161, %162 : vector<2x128xf32>
    %164 = arith.negf %163 : vector<2x128xf32>
    %165 = math.exp %164 : vector<2x128xf32>
    %cst_48 = arith.constant 1.000000e+00 : f32
    %166 = vector.broadcast %cst_48 : f32 to vector<2x128xf32>
    %167 = arith.addf %166, %165 : vector<2x128xf32>
    %168 = arith.divf %166, %167 : vector<2x128xf32>
    %169 = vector.extract_strided_slice %168 {offsets = [0, 0], sizes = [2, 32], strides = [1, 1]} : vector<2x128xf32> to vector<2x32xf32>
    %170 = vector.extract_strided_slice %168 {offsets = [0, 32], sizes = [2, 32], strides = [1, 1]} : vector<2x128xf32> to vector<2x32xf32>
    %171 = vector.extract_strided_slice %168 {offsets = [0, 64], sizes = [2, 32], strides = [1, 1]} : vector<2x128xf32> to vector<2x32xf32>
    %cst_49 = arith.constant 2.000000e+00 : f32
    %172 = vector.broadcast %cst_49 : f32 to vector<2x32xf32>
    %173 = arith.mulf %172, %171 : vector<2x32xf32>
    %cst_50 = arith.constant 1.000000e+00 : f32
    %174 = vector.broadcast %cst_50 : f32 to vector<2x32xf32>
    %175 = arith.subf %173, %174 : vector<2x32xf32>
    %176 = vector.extract_strided_slice %168 {offsets = [0, 96], sizes = [2, 32], strides = [1, 1]} : vector<2x128xf32> to vector<2x32xf32>
    %177 = arith.mulf %170, %157 : vector<2x32xf32>
    %178 = arith.mulf %169, %175 : vector<2x32xf32>
    %179 = arith.addf %177, %178 : vector<2x32xf32>
    %180 = math.tanh %179 : vector<2x32xf32>
    %181 = arith.mulf %176, %180 : vector<2x32xf32>
    %c12 = arith.constant 12 : index
    %c0_51 = arith.constant 0 : index
    %182 = vector.load %arg12[%c12, %c0_51] : memref<16x32xf32, #tpu.memory_space<vmem>>, vector<2x32xf32>
    tpu.vector_store %arg12[%c12, %c0_51], %181 {strides = array<i32>} : memref<16x32xf32, #tpu.memory_space<vmem>>, vector<2x32xf32>,
    %183 = vector.extract_strided_slice %23 {offsets = [14, 0], sizes = [2, 128], strides = [1, 1]} : vector<16x128xf32> to vector<2x128xf32>
    %cst_52 = arith.constant dense<0.000000e+00> : vector<2x128xf32>
    %184 = tpu.matmul %181, %26, %cst_52 {dimension_numbers = #tpu.dot_dimension_numbers<[1], [0], [0], [1], [0, 0, 1, 1], [], []>} : vector<2x32xf32>, vector<32x128xf32>, vector<2x128xf32> -> vector<2x128xf32>
    %185 = arith.addf %183, %184 : vector<2x128xf32>
    %186 = arith.negf %185 : vector<2x128xf32>
    %187 = math.exp %186 : vector<2x128xf32>
    %cst_53 = arith.constant 1.000000e+00 : f32
    %188 = vector.broadcast %cst_53 : f32 to vector<2x128xf32>
    %189 = arith.addf %188, %187 : vector<2x128xf32>
    %190 = arith.divf %188, %189 : vector<2x128xf32>
    %191 = vector.extract_strided_slice %190 {offsets = [0, 0], sizes = [2, 32], strides = [1, 1]} : vector<2x128xf32> to vector<2x32xf32>
    %192 = vector.extract_strided_slice %190 {offsets = [0, 32], sizes = [2, 32], strides = [1, 1]} : vector<2x128xf32> to vector<2x32xf32>
    %193 = vector.extract_strided_slice %190 {offsets = [0, 64], sizes = [2, 32], strides = [1, 1]} : vector<2x128xf32> to vector<2x32xf32>
    %cst_54 = arith.constant 2.000000e+00 : f32
    %194 = vector.broadcast %cst_54 : f32 to vector<2x32xf32>
    %195 = arith.mulf %194, %193 : vector<2x32xf32>
    %cst_55 = arith.constant 1.000000e+00 : f32
    %196 = vector.broadcast %cst_55 : f32 to vector<2x32xf32>
    %197 = arith.subf %195, %196 : vector<2x32xf32>
    %198 = vector.extract_strided_slice %190 {offsets = [0, 96], sizes = [2, 32], strides = [1, 1]} : vector<2x128xf32> to vector<2x32xf32>
    %199 = arith.mulf %192, %179 : vector<2x32xf32>
    %200 = arith.mulf %191, %197 : vector<2x32xf32>
    %201 = arith.addf %199, %200 : vector<2x32xf32>
    %202 = math.tanh %201 : vector<2x32xf32>
    %203 = arith.mulf %198, %202 : vector<2x32xf32>
    %c14 = arith.constant 14 : index
    %c0_56 = arith.constant 0 : index
    %204 = vector.load %arg12[%c14, %c0_56] : memref<16x32xf32, #tpu.memory_space<vmem>>, vector<2x32xf32>
    tpu.vector_store %arg12[%c14, %c0_56], %203 {strides = array<i32>} : memref<16x32xf32, #tpu.memory_space<vmem>>, vector<2x32xf32>,
    %c0_57 = arith.constant 0 : index
    %c0_58 = arith.constant 0 : index
    %205 = vector.load %arg10[%c0_57, %c0_58] : memref<2x32xf32, #tpu.memory_space<vmem>>, vector<2x32xf32>
    tpu.vector_store %arg10[%c0_57, %c0_58], %203 {strides = array<i32>} : memref<2x32xf32, #tpu.memory_space<vmem>>, vector<2x32xf32>,
    %c0_59 = arith.constant 0 : index
    %c0_60 = arith.constant 0 : index
    %206 = vector.load %arg11[%c0_59, %c0_60] : memref<2x32xf32, #tpu.memory_space<vmem>>, vector<2x32xf32>
    tpu.vector_store %arg11[%c0_59, %c0_60], %201 {strides = array<i32>} : memref<2x32xf32, #tpu.memory_space<vmem>>, vector<2x32xf32>,
    %c0_61 = arith.constant 0 : index
    %c0_62 = arith.constant 0 : index
    %207 = vector.load %arg12[%c0_61, %c0_62] : memref<16x32xf32, #tpu.memory_space<vmem>>, vector<16x32xf32>
    %c0_63 = arith.constant 0 : index
    %c0_64 = arith.constant 0 : index
    %208 = vector.load %arg7[%c0_63, %c0_64] : memref<32x16xf32, #tpu.memory_space<vmem>>, vector<32x16xf32>
    %cst_65 = arith.constant dense<0.000000e+00> : vector<16x16xf32>
    %209 = tpu.matmul %207, %208, %cst_65 {dimension_numbers = #tpu.dot_dimension_numbers<[1], [0], [0], [1], [0, 0, 1, 1], [], []>} : vector<16x32xf32>, vector<32x16xf32>, vector<16x16xf32> -> vector<16x16xf32>
    %c0_66 = arith.constant 0 : index
    %c0_67 = arith.constant 0 : index
    %210 = vector.load %arg8[%c0_66, %c0_67] : memref<1x16xf32, #tpu.memory_space<vmem>>, vector<1x16xf32>
    %211 = vector.broadcast %210 : vector<1x16xf32> to vector<16x16xf32>
    %212 = arith.addf %209, %211 : vector<16x16xf32>
    %c0_68 = arith.constant 0 : index
    %c0_69 = arith.constant 0 : index
    %213 = vector.load %arg9[%c0_68, %c0_69] : memref<16x16xf32, #tpu.memory_space<vmem>>, vector<16x16xf32>
    tpu.vector_store %arg9[%c0_68, %c0_69], %212 {strides = array<i32>} : memref<16x16xf32, #tpu.memory_space<vmem>>, vector<16x16xf32>,
    return
  }
}

</mosaic_0001>

<llo_original>
// kernel: tpu_custom_call.1
$region0: #{tpu_custom_call.1}
  #allocation0 [shape = 'u32[]', space=smem, size = 0x4, offset = 0x4, fixed_abs, tag = 'smem constant byte address 0x4 - core index']
  #allocation1 [shape = 'u32[72,128]{1,0:T(1,128)}', space=vmem, size = 0x9000, scoped, tag = 'internal scratch']
  #allocation2 [shape = 'f32[16,32]{1,0:T(8,128)}', space=vmem, size = 0x2000, scoped, tag = 'scratch operand']
  %s0 = inlined_call_operand.vmem [shape: s32[1,16], index: 0, kind: input, shape index: {}]
  %s1 = inlined_call_operand.vmem [shape: f32[16,32], index: 1, kind: input, shape index: {}]
  %s2 = inlined_call_operand.vmem [shape: f32[2,32], index: 2, kind: input, shape index: {}]
  %s3 = inlined_call_operand.hbm [shape: f32[2,32], index: 3, kind: input, shape index: {}]
  %s4 = inlined_call_operand.vmem [shape: f32[32,128], index: 4, kind: input, shape index: {}]
  %s5 = inlined_call_operand.hbm [shape: f32[32,128], index: 5, kind: input, shape index: {}]
  %s6 = inlined_call_operand.vmem [shape: f32[1,128], index: 6, kind: input, shape index: {}]
  %s7 = inlined_call_operand.vmem [shape: f32[32,16], index: 7, kind: input, shape index: {}]
  %s8 = inlined_call_operand.vmem [shape: f32[1,16], index: 8, kind: input, shape index: {}]
  %s9 = inlined_call_operand.hbm [shape: f32[16,16], index: 9, kind: output, shape index: {0}]
  %s10 = inlined_call_operand.hbm [shape: f32[2,32], index: 10, kind: output, shape index: {1}]
  %s11 = inlined_call_operand.hbm [shape: f32[2,32], index: 11, kind: output, shape index: {2}]
  %12 = xla_tuple %s9, %s10, %s11
  %s13 = sld [smem:[#allocation0]]
  $region70: #{tpu_custom_call.1} parent=0
    _
  %s15 = ssub.s32 1, %s13
  %s16 = scalar_select 0, %s15, %s13
  $region1: #{tpu_custom_call.1} parent=0
    #allocation3 [shape = 'u8[1024]{0}', space=vmem, size = 0x400, scoped, tag = 'input window, operand 3, single buffered']
    #allocation4 [shape = 's32[1]{0}', space=sflag, size = 0x4, scoped, tag = 'scoped memory for tpu_custom_call.1']
    #allocation5 [shape = 's32[1]{0}', space=sflag, size = 0x4, scoped, tag = 'scoped memory for tpu_custom_call.1']
    #allocation6 [shape = 'u8[16384]{0}', space=vmem, size = 0x4000, scoped, tag = 'input window, operand 5, single buffered']
    #allocation7 [shape = 's32[1]{0}', space=sflag, size = 0x4, scoped, tag = 'scoped memory for tpu_custom_call.1']
    #allocation8 [shape = 'u8[8192]{0}', space=vmem, size = 0x2000, scoped, tag = 'output window, operand 0, single buffered']
    #allocation9 [shape = 'u8[1024]{0}', space=vmem, size = 0x400, scoped, tag = 'output window, operand 1, single buffered']
    #allocation10 [shape = 's32[1]{0}', space=sflag, size = 0x4, scoped, tag = 'scoped memory for tpu_custom_call.1']
    #allocation11 [shape = 'u8[1024]{0}', space=vmem, size = 0x400, scoped, tag = 'output window, operand 2, single buffered']
    %17 = vsyncpa [#allocation4], 0
    %18 = vsyncpa [#allocation7], 0
    %19 = vsyncpa [#allocation5], 0
    %20 = vsyncpa [#allocation10], 0
    // Predicated region
    $region2: #{tpu_custom_call.1} parent=1 // pred_check
      _
    $region3: #{tpu_custom_call.1} parent=1 // pred_check_branch
      %22 = sbr.rel (0) target = $region5
    $region4: #{tpu_custom_call.1} parent=1 // pred_region
      _
    $region5: #{tpu_custom_call.1} parent=1 // pred_fallthru
      _
    // Predicated region
    $region6: #{tpu_custom_call.1} parent=1 // pred_check
      _
    $region7: #{tpu_custom_call.1} parent=1 // pred_check_branch
      %24 = sbr.rel (0) target = $region9
    $region8: #{tpu_custom_call.1} parent=1 // pred_region
      _
    $region9: #{tpu_custom_call.1} parent=1 // pred_fallthru
      _
    // Predicated region
    $region10: #{tpu_custom_call.1} parent=1 // pred_check
      _
    $region11: #{tpu_custom_call.1} parent=1 // pred_check_branch
      %26 = sbr.rel (0) target = $region13
    $region12: #{tpu_custom_call.1} parent=1 // pred_region
      _
    $region13: #{tpu_custom_call.1} parent=1 // pred_fallthru
      _
    // Predicated region
    $region14: #{tpu_custom_call.1} parent=1 // pred_check
      _
    $region15: #{tpu_custom_call.1} parent=1 // pred_check_branch
      %28 = sbr.rel (0) target = $region17
    $region16: #{tpu_custom_call.1} parent=1 // pred_region
      %30 = vsyncadd [#allocation4], 0
      %s32 = sshll.u32 %s3, 4
      %s33 = int_to_ptr.hbm [resolvable:$true] %s32
      %s34 = sshll.u32 [#allocation3], 4
      %s35 = int_to_ptr.vmem [resolvable:$true] %s34
      %37 = dma.hbm_to_vmem [thread:$0]  %s33, 32, %s35, [#allocation4]
    $region17: #{tpu_custom_call.1} parent=1 // pred_fallthru
      _
    // Predicated region
    $region18: #{tpu_custom_call.1} parent=1 // pred_check
      _
    $region19: #{tpu_custom_call.1} parent=1 // pred_check_branch
      %39 = sbr.rel (0) target = $region21
    $region20: #{tpu_custom_call.1} parent=1 // pred_region
      _
    $region21: #{tpu_custom_call.1} parent=1 // pred_fallthru
      _
    // Predicated region
    $region22: #{tpu_custom_call.1} parent=1 // pred_check
      _
    $region23: #{tpu_custom_call.1} parent=1 // pred_check_branch
      %41 = sbr.rel (0) target = $region25
    $region24: #{tpu_custom_call.1} parent=1 // pred_region
      %43 = vsyncadd [#allocation7], 0
      %s44 = sshll.u32 %s5, 4
      %s45 = int_to_ptr.hbm [resolvable:$true] %s44
      %s46 = sshll.u32 [#allocation6], 4
      %s47 = int_to_ptr.vmem [resolvable:$true] %s46
      %52 = dma.hbm_to_vmem [thread:$0]  %s45, 512, %s47, [#allocation7], 128, 128, 8
    $region25: #{tpu_custom_call.1} parent=1 // pred_fallthru
      _
    // Predicated region
    $region26: #{tpu_custom_call.1} parent=1 // pred_check
      _
    $region27: #{tpu_custom_call.1} parent=1 // pred_check_branch
      %54 = sbr.rel (0) target = $region29
    $region28: #{tpu_custom_call.1} parent=1 // pred_region
      _
    $region29: #{tpu_custom_call.1} parent=1 // pred_fallthru
      _
    // Predicated region
    $region30: #{tpu_custom_call.1} parent=1 // pred_check
      _
    $region31: #{tpu_custom_call.1} parent=1 // pred_check_branch
      %56 = sbr.rel (0) target = $region33
    $region32: #{tpu_custom_call.1} parent=1 // pred_region
      _
    $region33: #{tpu_custom_call.1} parent=1 // pred_fallthru
      _
    // Predicated region
    $region34: #{tpu_custom_call.1} parent=1 // pred_check
      _
    $region35: #{tpu_custom_call.1} parent=1 // pred_check_branch
      %58 = sbr.rel (0) target = $region37
    $region36: #{tpu_custom_call.1} parent=1 // pred_region
      _
    $region37: #{tpu_custom_call.1} parent=1 // pred_fallthru
      _
    // Predicated region
    $region38: #{tpu_custom_call.1} parent=1 // pred_check
      _
    $region39: #{tpu_custom_call.1} parent=1 // pred_check_branch
      %60 = sbr.rel (0) target = $region41
    $region40: #{tpu_custom_call.1} parent=1 // pred_region
      %62 = dma.done [#allocation4], 32
    $region41: #{tpu_custom_call.1} parent=1 // pred_fallthru
      _
    // Predicated region
    $region42: #{tpu_custom_call.1} parent=1 // pred_check
      _
    $region43: #{tpu_custom_call.1} parent=1 // pred_check_branch
      %64 = sbr.rel (0) target = $region45
    $region44: #{tpu_custom_call.1} parent=1 // pred_region
      %66 = dma.done [#allocation7], 512
    $region45: #{tpu_custom_call.1} parent=1 // pred_fallthru
      _
    %v67 = vld [vmem:[%s0] sm:$0x1]
    %v68 = vlaneseq
    %v69 = vshrl.u32 %v68, 7
    %v70 = vadd.s32 %v69, 8
    %v71 = vperm.slane %v67, 0
    %vm72 = vcmp.eq.s32.totalorder %v69, %v71
    %vm73 = vcmp.eq.s32.totalorder %v70, %v71
    %v74 = vsel %vm72, 1, 0
    %v75 = vsel %vm73, 1, 0
    %v76 = vcvt.s32.f32 %v74
    %v77 = vcvt.s32.f32 %v75
    %v78 = vld [vmem:[%s1] sm:$0xff]
    %v79 = vld [vmem:[%s1 + $0x8] sm:$0xff]
    %80 = vxpose.xlu0.b32.start [1/16] %v76, 128
    %81 = vxpose.xlu0.b32.cont [2/16] %v77, 128
    %82 = vxpose.xlu0.b32.cont [3/16] 0.0, 128
    %83 = vxpose.xlu0.b32.cont [4/16] 0.0, 128
    %84 = vxpose.xlu0.b32.cont [5/16] 0.0, 128
    %85 = vxpose.xlu0.b32.cont [6/16] 0.0, 128
    %86 = vxpose.xlu0.b32.cont [7/16] 0.0, 128
    %87 = vxpose.xlu0.b32.cont [8/16] 0.0, 128
    %88 = vxpose.xlu0.b32.cont [9/16] 0.0, 128
    %89 = vxpose.xlu0.b32.cont [10/16] 0.0, 128
    %90 = vxpose.xlu0.b32.cont [11/16] 0.0, 128
    %91 = vxpose.xlu0.b32.cont [12/16] 0.0, 128
    %92 = vxpose.xlu0.b32.cont [13/16] 0.0, 128
    %93 = vxpose.xlu0.b32.cont [14/16] 0.0, 128
    %94 = vxpose.xlu0.b32.cont [15/16] 0.0, 128
    %95 = vxpose.xlu0.b32.end [16/16] 0.0, 128
    %v96 = vpop.trf.xlu0
    %v97 = vpop.trf.xlu0
    %v98 = vpop.trf.xlu0
    %v99 = vpop.trf.xlu0
    %v100 = vpop.trf.xlu0
    %v101 = vpop.trf.xlu0
    %v102 = vpop.trf.xlu0
    %v103 = vpop.trf.xlu0
    %v104 = vpop.trf.xlu0
    %v105 = vpop.trf.xlu0
    %v106 = vpop.trf.xlu0
    %v107 = vpop.trf.xlu0
    %v108 = vpop.trf.xlu0
    %v109 = vpop.trf.xlu0
    %v110 = vpop.trf.xlu0
    %v111 = vpop.trf.xlu0
    %vm112 = vcmask 130048
    %v114 = vsel %vm112, %v96, 0
    %v117 = vsel %vm112, %v97, 0
    %119 = vmatpush.msra.mxu0 0.0
    %120 = vmatpush.msra.mxu0 0.0
    %121 = vmatpush.msra.mxu0 0.0
    %122 = vmatpush.msra.mxu0 0.0
    %123 = vmatpush.msra.mxu0 0.0
    %124 = vmatpush.msra.mxu0 0.0
    %125 = vmatpush.msra.mxu0 0.0
    %126 = vmatpush.msra.mxu0 0.0
    %127 = vmatpush.msra.mxu0 0.0
    %128 = vmatpush.msra.mxu0 0.0
    %129 = vmatpush.msra.mxu0 0.0
    %130 = vmatpush.msra.mxu0 0.0
    %131 = vmatpush.msra.mxu0 0.0
    %132 = vmatpush.msra.mxu0 0.0
    %133 = vmatpush.msra.mxu0 %v79
    %134 = vmatpush.msra.mxu0 %v78
    %135 = vmatmul.f32.gmra.mxu0 %v114
    %v136 = vpop.f32.mrf.mxu0
    %v137 = vadd.f32 0.0, %v136
    %138 = vmatmul.f32.gmra.mxu0 %v117
    %v139 = vpop.f32.mrf.mxu0
    %v140 = vadd.f32 0.0, %v139
    %141 = vdwg.mxu0
    %v142 = vlaneseq
    %v143 = vand.u32 %v142, 127
    %vm144 = vcmp.ge.s32.totalorder %v143, 64
    %vm145 = vcmp.lt.s32.totalorder %v143, 96
    %vm146 = vmand %vm144, %vm145
    %v147 = vsel %vm146, 2.0, 1.0
    %v148 = vld [vmem:[%s4] sm:$0xff]
    %v149 = vld [vmem:[%s4 + $0x8] sm:$0xff]
    %v150 = vld [vmem:[%s4 + $0x10] sm:$0xff]
    %v151 = vld [vmem:[%s4 + $0x18] sm:$0xff]
    %v152 = vld [vmem:[%s6] sm:$0x1]
    %v154 = vperm.slane %v152, 0
    %vm156 = vcmask 261120
    %v158 = vsel %vm156, %v137, 0
    %v161 = vsel %vm156, %v140, 0
    %163 = vmatpush.msra.mxu0 0.0
    %164 = vmatpush.msra.mxu0 0.0
    %165 = vmatpush.msra.mxu0 0.0
    %166 = vmatpush.msra.mxu0 0.0
    %167 = vmatpush.msra.mxu0 0.0
    %168 = vmatpush.msra.mxu0 0.0
    %169 = vmatpush.msra.mxu0 0.0
    %170 = vmatpush.msra.mxu0 0.0
    %171 = vmatpush.msra.mxu0 0.0
    %172 = vmatpush.msra.mxu0 0.0
    %173 = vmatpush.msra.mxu0 0.0
    %174 = vmatpush.msra.mxu0 0.0
    %175 = vmatpush.msra.mxu0 %v151
    %176 = vmatpush.msra.mxu0 %v150
    %177 = vmatpush.msra.mxu0 %v149
    %178 = vmatpush.msra.mxu0 %v148
    %179 = vmatmul.f32.gmra.mxu0 %v158
    %v180 = vpop.f32.mrf.mxu0
    %v181 = vadd.f32 %v154, %v180
    %182 = vmatmul.f32.gmra.mxu0 %v161
    %v183 = vpop.f32.mrf.mxu0
    %v184 = vadd.f32 %v154, %v183
    %185 = vdwg.mxu0
    %v186 = vmul.f32 %v181, %v147
    %v187 = vmul.f32 %v184, %v147
    %v188 = vld [vmem:[#allocation6] sm:$0xff]
    %v189 = vld [vmem:[#allocation6 + $0x8] sm:$0xff]
    %v190 = vld [vmem:[#allocation6 + $0x10] sm:$0xff]
    %v191 = vld [vmem:[#allocation6 + $0x18] sm:$0xff]
    %v192 = vmul.f32 %v188, %v147
    %v193 = vmul.f32 %v189, %v147
    %v194 = vmul.f32 %v190, %v147
    %v195 = vmul.f32 %v191, %v147
    %v196 = vld [vmem:[%s2] sm:$0x3]
    %v197 = vld [vmem:[#allocation3] sm:$0x3]
    %v199 = vsel %vm156, %v196, 0
    %201 = vmatpush.msra.mxu0 0.0
    %202 = vmatpush.msra.mxu0 0.0
    %203 = vmatpush.msra.mxu0 0.0
    %204 = vmatpush.msra.mxu0 0.0
    %205 = vmatpush.msra.mxu0 0.0
    %206 = vmatpush.msra.mxu0 0.0
    %207 = vmatpush.msra.mxu0 0.0
    %208 = vmatpush.msra.mxu0 0.0
    %209 = vmatpush.msra.mxu0 0.0
    %210 = vmatpush.msra.mxu0 0.0
    %211 = vmatpush.msra.mxu0 0.0
    %212 = vmatpush.msra.mxu0 0.0
    %213 = vmatpush.msra.mxu0 %v195
    %214 = vmatpush.msra.mxu0 %v194
    %215 = vmatpush.msra.mxu0 %v193
    %216 = vmatpush.msra.mxu0 %v192
    %217 = vmatmul.f32.gmra.mxu0 %v199
    %v218 = vpop.f32.mrf.mxu0
    %v219 = vadd.f32 0.0, %v218
    %220 = vdwg.mxu0
    %v221 = vadd.f32 %v186, %v219
    %v222 = vxor.u32 %v221, 2147483648
    %v223 = vmul.f32 %v222, 1.442695
    %v224 = vpow.pop %v223
    %v225 = vadd.f32 %v224, 1.0
    %v226 = vrcp.pop %v225
    %v227 = vmul.f32 %v225, %v226
    %v228 = vsub.f32 1.0, %v227
    %v229 = vmul.f32 %v226, %v228
    %v230 = vadd.f32 %v226, %v229
    %vm231 = vweird.f32 %v225
    %vm232 = vweird.f32 %v226
    %vm233 = vmor %vm231, %vm232
    %v234 = vsel %vm233, %v226, %v230
    %v235 = vand.u32 2147483647, %v225
    %vm236 = vcmp.eq.f32.partialorder %v235, 8.507059e+37
    %v237 = vand.u32 %v225, 2147483648
    %v238 = vor.u32 1.1754944e-38, %v237
    %v239 = vsel %vm236, %v238, %v234
    %v240 = vmul.f32 1.0, %v239
    %v241 = vmul.f32 %v240, 2.0
    %v242 = vsub.f32 %v241, 1.0
    %244 = vrot.lane.b32.xlu0 %v197, 32
    %v245 = vpop.permute.xlu0 %244
    %v247 = vmul.f32 %v240, %v245
    %249 = vrot.lane.b32.xlu0 %v242, 64
    %v250 = vpop.permute.xlu0 %249
    %v252 = vmul.f32 %v240, %v250
    %254 = vrot.lane.b32.xlu0 %v252, 32
    %v255 = vpop.permute.xlu0 %254
    %v257 = vadd.f32 %v247, %v255
    %v258 = vtanh.pop %v257
    %260 = vrot.lane.b32.xlu0 %v258, 64
    %v261 = vpop.permute.xlu0 %260
    %v263 = vmul.f32 %v240, %v261
    %265 = vrot.lane.b32.xlu0 %v263, 32
    %v266 = vpop.permute.xlu0 %265
    %vm268 = vcmask 254976
    %269 = vst.msk [vmem:[#allocation2] sm:$0x3] %vm268, %v266
    %v270 = vsel %vm156, %v266, 0
    %272 = vmatpush.msra.mxu0 0.0
    %273 = vmatpush.msra.mxu0 0.0
    %274 = vmatpush.msra.mxu0 0.0
    %275 = vmatpush.msra.mxu0 0.0
    %276 = vmatpush.msra.mxu0 0.0
    %277 = vmatpush.msra.mxu0 0.0
    %278 = vmatpush.msra.mxu0 0.0
    %279 = vmatpush.msra.mxu0 0.0
    %280 = vmatpush.msra.mxu0 0.0
    %281 = vmatpush.msra.mxu0 0.0
    %282 = vmatpush.msra.mxu0 0.0
    %283 = vmatpush.msra.mxu0 0.0
    %284 = vmatpush.msra.mxu0 %v195
    %285 = vmatpush.msra.mxu0 %v194
    %286 = vmatpush.msra.mxu0 %v193
    %287 = vmatpush.msra.mxu0 %v192
    %288 = vmatmul.f32.gmra.mxu0 %v270
    %v289 = vpop.f32.mrf.mxu0
    %v290 = vadd.f32 0.0, %v289
    %291 = vdwg.mxu0
    %v293 = vrot.slane %v290, 6
    %v295 = vadd.f32 %v186, %v293
    %v296 = vxor.u32 %v295, 2147483648
    %v297 = vmul.f32 %v296, 1.442695
    %v298 = vpow.pop %v297
    %v299 = vadd.f32 %v298, 1.0
    %v300 = vrcp.pop %v299
    %v301 = vmul.f32 %v299, %v300
    %v302 = vsub.f32 1.0, %v301
    %v303 = vmul.f32 %v300, %v302
    %v304 = vadd.f32 %v300, %v303
    %vm305 = vweird.f32 %v299
    %vm306 = vweird.f32 %v300
    %vm307 = vmor %vm305, %vm306
    %v308 = vsel %vm307, %v300, %v304
    %v309 = vand.u32 2147483647, %v299
    %vm310 = vcmp.eq.f32.partialorder %v309, 8.507059e+37
    %v311 = vand.u32 %v299, 2147483648
    %v312 = vor.u32 1.1754944e-38, %v311
    %v313 = vsel %vm310, %v312, %v308
    %v314 = vmul.f32 1.0, %v313
    %v315 = vmul.f32 %v314, 2.0
    %v316 = vsub.f32 %v315, 1.0
    %v318 = vrot.slane %v257, 6
    %v320 = vmul.f32 %v314, %v318
    %322 = vrot.lane.b32.xlu0 %v316, 64
    %v323 = vpop.permute.xlu0 %322
    %v325 = vmul.f32 %v314, %v323
    %327 = vrot.lane.b32.xlu0 %v325, 32
    %v328 = vpop.permute.xlu0 %327
    %v330 = vadd.f32 %v320, %v328
    %v331 = vtanh.pop %v330
    %333 = vrot.lane.b32.xlu0 %v331, 64
    %v334 = vpop.permute.xlu0 %333
    %v336 = vmul.f32 %v314, %v334
    %338 = vrot.lane.b32.xlu0 %v336, 32
    %v339 = vpop.permute.xlu0 %338
    %vm341 = vcmask 257026
    %342 = vst.msk [vmem:[#allocation2] sm:$0xc] %vm341, %v339
    %v343 = vrot.slane %v336, 2
    %344 = vrot.lane.b32.xlu0 %v343, 32
    %v345 = vpop.permute.xlu0 %344
    %v346 = vsel %vm156, %v345, 0
    %348 = vmatpush.msra.mxu0 0.0
    %349 = vmatpush.msra.mxu0 0.0
    %350 = vmatpush.msra.mxu0 0.0
    %351 = vmatpush.msra.mxu0 0.0
    %352 = vmatpush.msra.mxu0 0.0
    %353 = vmatpush.msra.mxu0 0.0
    %354 = vmatpush.msra.mxu0 0.0
    %355 = vmatpush.msra.mxu0 0.0
    %356 = vmatpush.msra.mxu0 0.0
    %357 = vmatpush.msra.mxu0 0.0
    %358 = vmatpush.msra.mxu0 0.0
    %359 = vmatpush.msra.mxu0 0.0
    %360 = vmatpush.msra.mxu0 %v195
    %361 = vmatpush.msra.mxu0 %v194
    %362 = vmatpush.msra.mxu0 %v193
    %363 = vmatpush.msra.mxu0 %v192
    %364 = vmatmul.f32.gmra.mxu0 %v346
    %v365 = vpop.f32.mrf.mxu0
    %v366 = vadd.f32 0.0, %v365
    %367 = vdwg.mxu0
    %v369 = vrot.slane %v366, 4
    %v371 = vadd.f32 %v186, %v369
    %v372 = vxor.u32 %v371, 2147483648
    %v373 = vmul.f32 %v372, 1.442695
    %v374 = vpow.pop %v373
    %v375 = vadd.f32 %v374, 1.0
    %v376 = vrcp.pop %v375
    %v377 = vmul.f32 %v375, %v376
    %v378 = vsub.f32 1.0, %v377
    %v379 = vmul.f32 %v376, %v378
    %v380 = vadd.f32 %v376, %v379
    %vm381 = vweird.f32 %v375
    %vm382 = vweird.f32 %v376
    %vm383 = vmor %vm381, %vm382
    %v384 = vsel %vm383, %v376, %v380
    %v385 = vand.u32 2147483647, %v375
    %vm386 = vcmp.eq.f32.partialorder %v385, 8.507059e+37
    %v387 = vand.u32 %v375, 2147483648
    %v388 = vor.u32 1.1754944e-38, %v387
    %v389 = vsel %vm386, %v388, %v384
    %v390 = vmul.f32 1.0, %v389
    %v391 = vmul.f32 %v390, 2.0
    %v392 = vsub.f32 %v391, 1.0
    %v394 = vrot.slane %v330, 6
    %v396 = vmul.f32 %v390, %v394
    %398 = vrot.lane.b32.xlu0 %v392, 64
    %v399 = vpop.permute.xlu0 %398
    %v401 = vmul.f32 %v390, %v399
    %403 = vrot.lane.b32.xlu0 %v401, 32
    %v404 = vpop.permute.xlu0 %403
    %v406 = vadd.f32 %v396, %v404
    %v407 = vtanh.pop %v406
    %409 = vrot.lane.b32.xlu0 %v407, 64
    %v410 = vpop.permute.xlu0 %409
    %v412 = vmul.f32 %v390, %v410
    %414 = vrot.lane.b32.xlu0 %v412, 32
    %v415 = vpop.permute.xlu0 %414
    %vm417 = vcmask 259076
    %418 = vst.msk [vmem:[#allocation2] sm:$0x30] %vm417, %v415
    %v419 = vrot.slane %v412, 4
    %420 = vrot.lane.b32.xlu0 %v419, 32
    %v421 = vpop.permute.xlu0 %420
    %v422 = vsel %vm156, %v421, 0
    %424 = vmatpush.msra.mxu0 0.0
    %425 = vmatpush.msra.mxu0 0.0
    %426 = vmatpush.msra.mxu0 0.0
    %427 = vmatpush.msra.mxu0 0.0
    %428 = vmatpush.msra.mxu0 0.0
    %429 = vmatpush.msra.mxu0 0.0
    %430 = vmatpush.msra.mxu0 0.0
    %431 = vmatpush.msra.mxu0 0.0
    %432 = vmatpush.msra.mxu0 0.0
    %433 = vmatpush.msra.mxu0 0.0
    %434 = vmatpush.msra.mxu0 0.0
    %435 = vmatpush.msra.mxu0 0.0
    %436 = vmatpush.msra.mxu0 %v195
    %437 = vmatpush.msra.mxu0 %v194
    %438 = vmatpush.msra.mxu0 %v193
    %439 = vmatpush.msra.mxu0 %v192
    %440 = vmatmul.f32.gmra.mxu0 %v422
    %v441 = vpop.f32.mrf.mxu0
    %v442 = vadd.f32 0.0, %v441
    %443 = vdwg.mxu0
    %v445 = vrot.slane %v442, 2
    %v447 = vadd.f32 %v186, %v445
    %v448 = vxor.u32 %v447, 2147483648
    %v449 = vmul.f32 %v448, 1.442695
    %v450 = vpow.pop %v449
    %v451 = vadd.f32 %v450, 1.0
    %v452 = vrcp.pop %v451
    %v453 = vmul.f32 %v451, %v452
    %v454 = vsub.f32 1.0, %v453
    %v455 = vmul.f32 %v452, %v454
    %v456 = vadd.f32 %v452, %v455
    %vm457 = vweird.f32 %v451
    %vm458 = vweird.f32 %v452
    %vm459 = vmor %vm457, %vm458
    %v460 = vsel %vm459, %v452, %v456
    %v461 = vand.u32 2147483647, %v451
    %vm462 = vcmp.eq.f32.partialorder %v461, 8.507059e+37
    %v463 = vand.u32 %v451, 2147483648
    %v464 = vor.u32 1.1754944e-38, %v463
    %v465 = vsel %vm462, %v464, %v460
    %v466 = vmul.f32 1.0, %v465
    %v467 = vmul.f32 %v466, 2.0
    %v468 = vsub.f32 %v467, 1.0
    %v470 = vrot.slane %v406, 6
    %v472 = vmul.f32 %v466, %v470
    %474 = vrot.lane.b32.xlu0 %v468, 64
    %v475 = vpop.permute.xlu0 %474
    %v477 = vmul.f32 %v466, %v475
    %479 = vrot.lane.b32.xlu0 %v477, 32
    %v480 = vpop.permute.xlu0 %479
    %v482 = vadd.f32 %v472, %v480
    %v483 = vtanh.pop %v482
    %485 = vrot.lane.b32.xlu0 %v483, 64
    %v486 = vpop.permute.xlu0 %485
    %v488 = vmul.f32 %v466, %v486
    %490 = vrot.lane.b32.xlu0 %v488, 32
    %v491 = vpop.permute.xlu0 %490
    %vm493 = vcmask 261126
    %494 = vst.msk [vmem:[#allocation2] sm:$0xc0] %vm493, %v491
    %v495 = vrot.slane %v488, 6
    %496 = vrot.lane.b32.xlu0 %v495, 32
    %v497 = vpop.permute.xlu0 %496
    %v498 = vsel %vm156, %v497, 0
    %500 = vmatpush.msra.mxu0 0.0
    %501 = vmatpush.msra.mxu0 0.0
    %502 = vmatpush.msra.mxu0 0.0
    %503 = vmatpush.msra.mxu0 0.0
    %504 = vmatpush.msra.mxu0 0.0
    %505 = vmatpush.msra.mxu0 0.0
    %506 = vmatpush.msra.mxu0 0.0
    %507 = vmatpush.msra.mxu0 0.0
    %508 = vmatpush.msra.mxu0 0.0
    %509 = vmatpush.msra.mxu0 0.0
    %510 = vmatpush.msra.mxu0 0.0
    %511 = vmatpush.msra.mxu0 0.0
    %512 = vmatpush.msra.mxu0 %v195
    %513 = vmatpush.msra.mxu0 %v194
    %514 = vmatpush.msra.mxu0 %v193
    %515 = vmatpush.msra.mxu0 %v192
    %516 = vmatmul.f32.gmra.mxu0 %v498
    %v517 = vpop.f32.mrf.mxu0
    %v518 = vadd.f32 0.0, %v517
    %519 = vdwg.mxu0
    %v520 = vadd.f32 %v187, %v518
    %v521 = vxor.u32 %v520, 2147483648
    %v522 = vmul.f32 %v521, 1.442695
    %v523 = vpow.pop %v522
    %v524 = vadd.f32 %v523, 1.0
    %v525 = vrcp.pop %v524
    %v526 = vmul.f32 %v524, %v525
    %v527 = vsub.f32 1.0, %v526
    %v528 = vmul.f32 %v525, %v527
    %v529 = vadd.f32 %v525, %v528
    %vm530 = vweird.f32 %v524
    %vm531 = vweird.f32 %v525
    %vm532 = vmor %vm530, %vm531
    %v533 = vsel %vm532, %v525, %v529
    %v534 = vand.u32 2147483647, %v524
    %vm535 = vcmp.eq.f32.partialorder %v534, 8.507059e+37
    %v536 = vand.u32 %v524, 2147483648
    %v537 = vor.u32 1.1754944e-38, %v536
    %v538 = vsel %vm535, %v537, %v533
    %v539 = vmul.f32 1.0, %v538
    %v540 = vmul.f32 %v539, 2.0
    %v541 = vsub.f32 %v540, 1.0
    %v543 = vrot.slane %v482, 6
    %v545 = vmul.f32 %v539, %v543
    %547 = vrot.lane.b32.xlu0 %v541, 64
    %v548 = vpop.permute.xlu0 %547
    %v550 = vmul.f32 %v539, %v548
    %552 = vrot.lane.b32.xlu0 %v550, 32
    %v553 = vpop.permute.xlu0 %552
    %v555 = vadd.f32 %v545, %v553
    %v556 = vtanh.pop %v555
    %558 = vrot.lane.b32.xlu0 %v556, 64
    %v559 = vpop.permute.xlu0 %558
    %v561 = vmul.f32 %v539, %v559
    %563 = vrot.lane.b32.xlu0 %v561, 32
    %v564 = vpop.permute.xlu0 %563
    %566 = vst.msk [vmem:[#allocation2 + $0x8] sm:$0x3] %vm268, %v564
    %v567 = vsel %vm156, %v564, 0
    %569 = vmatpush.msra.mxu0 0.0
    %570 = vmatpush.msra.mxu0 0.0
    %571 = vmatpush.msra.mxu0 0.0
    %572 = vmatpush.msra.mxu0 0.0
    %573 = vmatpush.msra.mxu0 0.0
    %574 = vmatpush.msra.mxu0 0.0
    %575 = vmatpush.msra.mxu0 0.0
    %576 = vmatpush.msra.mxu0 0.0
    %577 = vmatpush.msra.mxu0 0.0
    %578 = vmatpush.msra.mxu0 0.0
    %579 = vmatpush.msra.mxu0 0.0
    %580 = vmatpush.msra.mxu0 0.0
    %581 = vmatpush.msra.mxu0 %v195
    %582 = vmatpush.msra.mxu0 %v194
    %583 = vmatpush.msra.mxu0 %v193
    %584 = vmatpush.msra.mxu0 %v192
    %585 = vmatmul.f32.gmra.mxu0 %v567
    %v586 = vpop.f32.mrf.mxu0
    %v587 = vadd.f32 0.0, %v586
    %588 = vdwg.mxu0
    %v590 = vrot.slane %v587, 6
    %v592 = vadd.f32 %v187, %v590
    %v593 = vxor.u32 %v592, 2147483648
    %v594 = vmul.f32 %v593, 1.442695
    %v595 = vpow.pop %v594
    %v596 = vadd.f32 %v595, 1.0
    %v597 = vrcp.pop %v596
    %v598 = vmul.f32 %v596, %v597
    %v599 = vsub.f32 1.0, %v598
    %v600 = vmul.f32 %v597, %v599
    %v601 = vadd.f32 %v597, %v600
    %vm602 = vweird.f32 %v596
    %vm603 = vweird.f32 %v597
    %vm604 = vmor %vm602, %vm603
    %v605 = vsel %vm604, %v597, %v601
    %v606 = vand.u32 2147483647, %v596
    %vm607 = vcmp.eq.f32.partialorder %v606, 8.507059e+37
    %v608 = vand.u32 %v596, 2147483648
    %v609 = vor.u32 1.1754944e-38, %v608
    %v610 = vsel %vm607, %v609, %v605
    %v611 = vmul.f32 1.0, %v610
    %v612 = vmul.f32 %v611, 2.0
    %v613 = vsub.f32 %v612, 1.0
    %v615 = vrot.slane %v555, 6
    %v617 = vmul.f32 %v611, %v615
    %619 = vrot.lane.b32.xlu0 %v613, 64
    %v620 = vpop.permute.xlu0 %619
    %v622 = vmul.f32 %v611, %v620
    %624 = vrot.lane.b32.xlu0 %v622, 32
    %v625 = vpop.permute.xlu0 %624
    %v627 = vadd.f32 %v617, %v625
    %v628 = vtanh.pop %v627
    %630 = vrot.lane.b32.xlu0 %v628, 64
    %v631 = vpop.permute.xlu0 %630
    %v633 = vmul.f32 %v611, %v631
    %635 = vrot.lane.b32.xlu0 %v633, 32
    %v636 = vpop.permute.xlu0 %635
    %638 = vst.msk [vmem:[#allocation2 + $0x8] sm:$0xc] %vm341, %v636
    %v639 = vrot.slane %v633, 2
    %640 = vrot.lane.b32.xlu0 %v639, 32
    %v641 = vpop.permute.xlu0 %640
    %v642 = vsel %vm156, %v641, 0
    %644 = vmatpush.msra.mxu0 0.0
    %645 = vmatpush.msra.mxu0 0.0
    %646 = vmatpush.msra.mxu0 0.0
    %647 = vmatpush.msra.mxu0 0.0
    %648 = vmatpush.msra.mxu0 0.0
    %649 = vmatpush.msra.mxu0 0.0
    %650 = vmatpush.msra.mxu0 0.0
    %651 = vmatpush.msra.mxu0 0.0
    %652 = vmatpush.msra.mxu0 0.0
    %653 = vmatpush.msra.mxu0 0.0
    %654 = vmatpush.msra.mxu0 0.0
    %655 = vmatpush.msra.mxu0 0.0
    %656 = vmatpush.msra.mxu0 %v195
    %657 = vmatpush.msra.mxu0 %v194
    %658 = vmatpush.msra.mxu0 %v193
    %659 = vmatpush.msra.mxu0 %v192
    %660 = vmatmul.f32.gmra.mxu0 %v642
    %v661 = vpop.f32.mrf.mxu0
    %v662 = vadd.f32 0.0, %v661
    %663 = vdwg.mxu0
    %v665 = vrot.slane %v662, 4
    %v667 = vadd.f32 %v187, %v665
    %v668 = vxor.u32 %v667, 2147483648
    %v669 = vmul.f32 %v668, 1.442695
    %v670 = vpow.pop %v669
    %v671 = vadd.f32 %v670, 1.0
    %v672 = vrcp.pop %v671
    %v673 = vmul.f32 %v671, %v672
    %v674 = vsub.f32 1.0, %v673
    %v675 = vmul.f32 %v672, %v674
    %v676 = vadd.f32 %v672, %v675
    %vm677 = vweird.f32 %v671
    %vm678 = vweird.f32 %v672
    %vm679 = vmor %vm677, %vm678
    %v680 = vsel %vm679, %v672, %v676
    %v681 = vand.u32 2147483647, %v671
    %vm682 = vcmp.eq.f32.partialorder %v681, 8.507059e+37
    %v683 = vand.u32 %v671, 2147483648
    %v684 = vor.u32 1.1754944e-38, %v683
    %v685 = vsel %vm682, %v684, %v680
    %v686 = vmul.f32 1.0, %v685
    %v687 = vmul.f32 %v686, 2.0
    %v688 = vsub.f32 %v687, 1.0
    %v690 = vrot.slane %v627, 6
    %v692 = vmul.f32 %v686, %v690
    %694 = vrot.lane.b32.xlu0 %v688, 64
    %v695 = vpop.permute.xlu0 %694
    %v697 = vmul.f32 %v686, %v695
    %699 = vrot.lane.b32.xlu0 %v697, 32
    %v700 = vpop.permute.xlu0 %699
    %v702 = vadd.f32 %v692, %v700
    %v703 = vtanh.pop %v702
    %705 = vrot.lane.b32.xlu0 %v703, 64
    %v706 = vpop.permute.xlu0 %705
    %v708 = vmul.f32 %v686, %v706
    %710 = vrot.lane.b32.xlu0 %v708, 32
    %v711 = vpop.permute.xlu0 %710
    %713 = vst.msk [vmem:[#allocation2 + $0x8] sm:$0x30] %vm417, %v711
    %v714 = vrot.slane %v708, 4
    %715 = vrot.lane.b32.xlu0 %v714, 32
    %v716 = vpop.permute.xlu0 %715
    %v717 = vsel %vm156, %v716, 0
    %719 = vmatpush.msra.mxu0 0.0
    %720 = vmatpush.msra.mxu0 0.0
    %721 = vmatpush.msra.mxu0 0.0
    %722 = vmatpush.msra.mxu0 0.0
    %723 = vmatpush.msra.mxu0 0.0
    %724 = vmatpush.msra.mxu0 0.0
    %725 = vmatpush.msra.mxu0 0.0
    %726 = vmatpush.msra.mxu0 0.0
    %727 = vmatpush.msra.mxu0 0.0
    %728 = vmatpush.msra.mxu0 0.0
    %729 = vmatpush.msra.mxu0 0.0
    %730 = vmatpush.msra.mxu0 0.0
    %731 = vmatpush.msra.mxu0 %v195
    %732 = vmatpush.msra.mxu0 %v194
    %733 = vmatpush.msra.mxu0 %v193
    %734 = vmatpush.msra.mxu0 %v192
    %735 = vmatmul.f32.gmra.mxu0 %v717
    %v736 = vpop.f32.mrf.mxu0
    %v737 = vadd.f32 0.0, %v736
    %738 = vdwg.mxu0
    %v740 = vrot.slane %v737, 2
    %v742 = vadd.f32 %v187, %v740
    %v743 = vxor.u32 %v742, 2147483648
    %v744 = vmul.f32 %v743, 1.442695
    %v745 = vpow.pop %v744
    %v746 = vadd.f32 %v745, 1.0
    %v747 = vrcp.pop %v746
    %v748 = vmul.f32 %v746, %v747
    %v749 = vsub.f32 1.0, %v748
    %v750 = vmul.f32 %v747, %v749
    %v751 = vadd.f32 %v747, %v750
    %vm752 = vweird.f32 %v746
    %vm753 = vweird.f32 %v747
    %vm754 = vmor %vm752, %vm753
    %v755 = vsel %vm754, %v747, %v751
    %v756 = vand.u32 2147483647, %v746
    %vm757 = vcmp.eq.f32.partialorder %v756, 8.507059e+37
    %v758 = vand.u32 %v746, 2147483648
    %v759 = vor.u32 1.1754944e-38, %v758
    %v760 = vsel %vm757, %v759, %v755
    %v761 = vmul.f32 1.0, %v760
    %v762 = vmul.f32 %v761, 2.0
    %v763 = vsub.f32 %v762, 1.0
    %v765 = vrot.slane %v702, 6
    %v767 = vmul.f32 %v761, %v765
    %769 = vrot.lane.b32.xlu0 %v763, 64
    %v770 = vpop.permute.xlu0 %769
    %v772 = vmul.f32 %v761, %v770
    %774 = vrot.lane.b32.xlu0 %v772, 32
    %v775 = vpop.permute.xlu0 %774
    %v777 = vadd.f32 %v767, %v775
    %v778 = vtanh.pop %v777
    %780 = vrot.lane.b32.xlu0 %v778, 64
    %v781 = vpop.permute.xlu0 %780
    %v783 = vmul.f32 %v761, %v781
    %785 = vrot.lane.b32.xlu0 %v783, 32
    %v786 = vpop.permute.xlu0 %785
    %788 = vst.msk [vmem:[#allocation2 + $0x8] sm:$0xc0] %vm493, %v786
    %789 = vst.msk [vmem:[#allocation9 - $0x6] sm:$0xc0] %vm493, %v786
    %791 = vrot.lane.b32.xlu0 %v777, 96
    %v792 = vpop.permute.xlu0 %791
    %794 = vst.msk [vmem:[#allocation11 - $0x6] sm:$0xc0] %vm493, %v792
    %v795 = vld [vmem:[#allocation2] sm:$0xff]
    %v796 = vld [vmem:[#allocation2 + $0x8] sm:$0xff]
    %v797 = vld [vmem:[%s7] sm:$0xff]
    %v798 = vld [vmem:[%s7 + $0x8] sm:$0xff]
    %v799 = vld [vmem:[%s7 + $0x10] sm:$0xff]
    %v800 = vld [vmem:[%s7 + $0x18] sm:$0xff]
    %v801 = vld [vmem:[%s8] sm:$0x1]
    %v803 = vperm.slane %v801, 0
    %v806 = vsel %vm156, %v795, 0
    %v809 = vsel %vm156, %v796, 0
    %811 = vmatpush.msra.mxu0 0.0
    %812 = vmatpush.msra.mxu0 0.0
    %813 = vmatpush.msra.mxu0 0.0
    %814 = vmatpush.msra.mxu0 0.0
    %815 = vmatpush.msra.mxu0 0.0
    %816 = vmatpush.msra.mxu0 0.0
    %817 = vmatpush.msra.mxu0 0.0
    %818 = vmatpush.msra.mxu0 0.0
    %819 = vmatpush.msra.mxu0 0.0
    %820 = vmatpush.msra.mxu0 0.0
    %821 = vmatpush.msra.mxu0 0.0
    %822 = vmatpush.msra.mxu0 0.0
    %823 = vmatpush.msra.mxu0 %v800
    %824 = vmatpush.msra.mxu0 %v799
    %825 = vmatpush.msra.mxu0 %v798
    %826 = vmatpush.msra.mxu0 %v797
    %827 = vmatmul.f32.gmra.mxu0 %v806
    %v828 = vpop.f32.mrf.mxu0
    %v829 = vadd.f32 %v803, %v828
    %830 = vmatmul.f32.gmra.mxu0 %v809
    %v831 = vpop.f32.mrf.mxu0
    %v832 = vadd.f32 %v803, %v831
    %833 = vdwg.mxu0
    %834 = vst.msk [vmem:[#allocation8] sm:$0xff] %vm112, %v829
    %835 = vst.msk [vmem:[#allocation8 + $0x8] sm:$0xff] %vm112, %v832
    // Predicated region
    $region46: #{tpu_custom_call.1} parent=1 // pred_check
      _
    $region47: #{tpu_custom_call.1} parent=1 // pred_check_branch
      %837 = sbr.rel (0) target = $region49
    $region48: #{tpu_custom_call.1} parent=1 // pred_region
      %839 = vsyncadd [#allocation5], 0
      %s840 = sshll.u32 [#allocation8], 4
      %s841 = int_to_ptr.vmem [resolvable:$true] %s840
      %s842 = sshll.u32 %s9, 4
      %s843 = int_to_ptr.hbm [resolvable:$true] %s842
      %848 = dma.vmem_to_hbm [thread:$0]  %s841, 256, %s843, [#allocation5], 128, 128, 8
    $region49: #{tpu_custom_call.1} parent=1 // pred_fallthru
      _
    // Predicated region
    $region50: #{tpu_custom_call.1} parent=1 // pred_check
      _
    $region51: #{tpu_custom_call.1} parent=1 // pred_check_branch
      %850 = sbr.rel (0) target = $region53
    $region52: #{tpu_custom_call.1} parent=1 // pred_region
      %852 = vsyncadd [#allocation10], 0
      %s854 = sshll.u32 [#allocation9], 4
      %s855 = int_to_ptr.vmem [resolvable:$true] %s854
      %s856 = sshll.u32 %s10, 4
      %s857 = int_to_ptr.hbm [resolvable:$true] %s856
      %859 = dma.vmem_to_hbm [thread:$0]  %s855, 32, %s857, [#allocation10]
    $region53: #{tpu_custom_call.1} parent=1 // pred_fallthru
      _
    // Predicated region
    $region54: #{tpu_custom_call.1} parent=1 // pred_check
      _
    $region55: #{tpu_custom_call.1} parent=1 // pred_check_branch
      %861 = sbr.rel (0) target = $region57
    $region56: #{tpu_custom_call.1} parent=1 // pred_region
      %863 = vsyncadd [#allocation10], 0
      %s865 = sshll.u32 [#allocation11], 4
      %s866 = int_to_ptr.vmem [resolvable:$true] %s865
      %s867 = sshll.u32 %s11, 4
      %s868 = int_to_ptr.hbm [resolvable:$true] %s867
      %870 = dma.vmem_to_hbm [thread:$0]  %s866, 32, %s868, [#allocation10]
    $region57: #{tpu_custom_call.1} parent=1 // pred_fallthru
      _
    // Predicated region
    $region58: #{tpu_custom_call.1} parent=1 // pred_check
      _
    $region59: #{tpu_custom_call.1} parent=1 // pred_check_branch
      %872 = sbr.rel (0) target = $region61
    $region60: #{tpu_custom_call.1} parent=1 // pred_region
      %874 = dma.done [#allocation5], 256
    $region61: #{tpu_custom_call.1} parent=1 // pred_fallthru
      _
    // Predicated region
    $region62: #{tpu_custom_call.1} parent=1 // pred_check
      _
    $region63: #{tpu_custom_call.1} parent=1 // pred_check_branch
      %876 = sbr.rel (0) target = $region65
    $region64: #{tpu_custom_call.1} parent=1 // pred_region
      %878 = dma.done [#allocation10], 32
    $region65: #{tpu_custom_call.1} parent=1 // pred_fallthru
      _
    // Predicated region
    $region66: #{tpu_custom_call.1} parent=1 // pred_check
      _
    $region67: #{tpu_custom_call.1} parent=1 // pred_check_branch
      %880 = sbr.rel (0) target = $region69
    $region68: #{tpu_custom_call.1} parent=1 // pred_region
      %882 = dma.done [#allocation10], 32
    $region69: #{tpu_custom_call.1} parent=1 // pred_fallthru
      _
    %883 = vsyncpa [#allocation4], 1
    %884 = vsyncpa [#allocation7], 1
    %885 = vsyncpa [#allocation5], 1
    %886 = vsyncpa [#allocation10], 1

</llo_original>
